<compile_context>
chip_gen: v7x
topology: tpu7x:2x2x1
jax: 0.10.0
libtpu: 0.0.40
codegen_flags: <defaults>
</compile_context>

<pallas_src>
import functools

import jax
import jax.numpy as jnp
from jax import lax
from jax.experimental import pallas as pl
from jax.experimental.pallas import tpu as pltpu


def _round_up(x, m):
    return (x + m - 1) // m * m


# ---- Pass 1: conv tile in VMEM (discarded) -> per-tile BN partial stats ----
def _stats_kernel(p_ref, w_ref, psum_ref, psumsq_ref):
    acc = jnp.dot(p_ref[...], w_ref[...], preferred_element_type=jnp.float32)
    tm, cp = acc.shape
    g = acc.reshape(tm // 8, 8, cp)              # sublane-aligned partial reduce
    psum_ref[...] = jnp.sum(g, axis=0)           # (8, C_pad) f32 partials
    psumsq_ref[...] = jnp.sum(g * g, axis=0)


# ---- Pass 2: recompute conv tile, apply folded BN scale/shift (+ ReLU) -----
def _conv_bn_relu_kernel(p_ref, w_ref, scale_ref, shift_ref, o_ref, *,
                         cout, use_relu):
    acc = jnp.dot(p_ref[...], w_ref[...], preferred_element_type=jnp.float32)
    y = acc * scale_ref[...] + shift_ref[...]
    if use_relu:
        y = jnp.maximum(y, 0.0)
    o_ref[...] = y[:, :cout].astype(o_ref.dtype)  # store only useful channels


def conv_block(x_ndhwc, w_dhwio, gamma, beta, *, stride=(1, 1, 1),
               padding=(0, 0, 0), eps=1e-5, use_relu=True,
               row_tile=1024, mxu_dtype=jnp.bfloat16):
    """x_ndhwc: (N, D, H, W, Cin);  w_dhwio: (kd, kh, kw, Cin, Cout)."""
    N, D, H, W, Cin = x_ndhwc.shape
    kd, kh, kw, _, Cout = w_dhwio.shape
    assert Cout <= 128  # TODO(synk): add a Cout grid axis for Cout > 128.
    sd, sh, sw = stride
    pd, ph, pw = padding

    Dp, Hp, Wp = D + 2 * pd, H + 2 * ph, W + 2 * pw
    Do = (Dp - kd) // sd + 1
    Ho = (Hp - kh) // sh + 1
    Wo = (Wp - kw) // sw + 1
    M = N * Do * Ho * Wo
    K = kd * kh * kw * Cin

    K_pad = _round_up(K, 128)
    C_pad = _round_up(Cout, 128)

    # Row tile: big for pipeline efficiency, but keep >= 2 grid tiles when
    # possible so the 'parallel' axis can shard across v7x's 2 TensorCores.
    TM = row_tile
    if M > 256:
        TM = min(TM, _round_up((M + 1) // 2, 256))
    else:
        TM = min(TM, 256)
    assert TM % 8 == 0
    M_pad = _round_up(max(M, 1), TM)
    n_tiles = M_pad // TM

    # ---- im2col: single bf16 materialization of the padded patch buffer ----
    # TODO(synk): move im2col into the kernel (DMA halo'd x slabs, build the
    # (TM, K_pad) patch block in VMEM) to drop the remaining HBM amplification.
    xp = jnp.pad(x_ndhwc.astype(mxu_dtype),
                 ((0, 0), (pd, pd), (ph, ph), (pw, pw), (0, 0)))
    patches = jnp.zeros((M_pad, K_pad), mxu_dtype)
    col = 0
    for dk in range(kd):
        for hk in range(kh):
            for wk in range(kw):
                tap = lax.slice(
                    xp,
                    (0, dk, hk, wk, 0),
                    (N,
                     dk + (Do - 1) * sd + 1,
                     hk + (Ho - 1) * sh + 1,
                     wk + (Wo - 1) * sw + 1,
                     Cin),
                    (1, sd, sh, sw, 1)).reshape(M, Cin)
                patches = lax.dynamic_update_slice(patches, tap, (0, col))
                col += Cin

    w_mat = jnp.pad(w_dhwio.reshape(K, Cout).astype(mxu_dtype),
                    ((0, K_pad - K), (0, C_pad - Cout)))

    itemsize = jnp.dtype(mxu_dtype).itemsize
    matmul_flops = 2 * M_pad * K_pad * C_pad
    patch_bytes = M_pad * K_pad * itemsize
    w_bytes = K_pad * C_pad * itemsize

    cparams = pltpu.CompilerParams(
        dimension_semantics=("parallel",),
        vmem_limit_bytes=32 * 1024 * 1024)   # fits v7x's 64 MiB physical VMEM

    psum, psumsq = pl.pallas_call(
        _stats_kernel,
        out_shape=(jax.ShapeDtypeStruct((n_tiles * 8, C_pad), jnp.float32),
                   jax.ShapeDtypeStruct((n_tiles * 8, C_pad), jnp.float32)),
        grid=(n_tiles,),
        in_specs=[pl.BlockSpec((TM, K_pad), lambda i: (i, 0)),
                  pl.BlockSpec((K_pad, C_pad), lambda i: (0, 0))],
        out_specs=(pl.BlockSpec((8, C_pad), lambda i: (i, 0)),
                   pl.BlockSpec((8, C_pad), lambda i: (i, 0))),
        compiler_params=cparams,
        cost_estimate=pl.CostEstimate(
            flops=matmul_flops,
            transcendentals=0,
            bytes_accessed=patch_bytes + w_bytes + 2 * n_tiles * 8 * C_pad * 4),
    )(patches, w_mat)

    # Exact batch statistics (padded rows contribute zero to both sums; divide
    # by the true M).  Tiny per-channel math -> plain JAX glue.
    # NOTE: var = E[x^2] - E[x]^2 in f32 -- fine for modest M; a Welford /
    # centered merge would be needed for very large M with |mean| >> std.
    sum_c = jnp.sum(psum, axis=0)[:Cout]
    sumsq_c = jnp.sum(psumsq, axis=0)[:Cout]
    mean = sum_c / M
    var = jnp.maximum(sumsq_c / M - mean * mean, 0.0)
    scale = gamma.astype(jnp.float32) * lax.rsqrt(var + eps)
    shift = beta.astype(jnp.float32) - mean * scale
    scale_p = jnp.pad(scale, (0, C_pad - Cout)).reshape(1, C_pad)
    shift_p = jnp.pad(shift, (0, C_pad - Cout)).reshape(1, C_pad)

    out_dtype = x_ndhwc.dtype
    out_flat = pl.pallas_call(
        functools.partial(_conv_bn_relu_kernel, cout=Cout, use_relu=use_relu),
        out_shape=jax.ShapeDtypeStruct((M_pad, Cout), out_dtype),
        grid=(n_tiles,),
        in_specs=[pl.BlockSpec((TM, K_pad), lambda i: (i, 0)),
                  pl.BlockSpec((K_pad, C_pad), lambda i: (0, 0)),
                  pl.BlockSpec((1, C_pad), lambda i: (0, 0)),
                  pl.BlockSpec((1, C_pad), lambda i: (0, 0))],
        out_specs=pl.BlockSpec((TM, Cout), lambda i: (i, 0)),
        compiler_params=cparams,
        cost_estimate=pl.CostEstimate(
            flops=matmul_flops + 3 * M_pad * C_pad,
            transcendentals=0,
            bytes_accessed=(patch_bytes + w_bytes + 2 * C_pad * 4
                            + M_pad * Cout * jnp.dtype(out_dtype).itemsize)),
    )(patches, w_mat, scale_p, shift_p)

    return out_flat[:M].reshape(N, Do, Ho, Wo, Cout)


def reference_conv_block(x_ndhwc, w_dhwio, gamma, beta,
                         stride, padding, eps=1e-5, use_relu=True):
    """Pure-JAX f32 reference (same semantics as the PyTorch module in train mode)."""
    conv = lax.conv_general_dilated(
        x_ndhwc.astype(jnp.float32), w_dhwio.astype(jnp.float32),
        window_strides=stride,
        padding=[(p, p) for p in padding],
        dimension_numbers=("NDHWC", "DHWIO", "NDHWC"))
    mean = jnp.mean(conv, axis=(0, 1, 2, 3), keepdims=True)
    var = jnp.mean((conv - mean) ** 2, axis=(0, 1, 2, 3), keepdims=True)
    y = (conv - mean) * lax.rsqrt(var + eps) * gamma + beta
    if use_relu:
        y = jnp.maximum(y, 0.0)
    return y.astype(x_ndhwc.dtype)


if __name__ == "__main__":
    # ConvBlock(in_features=4, out_features=8, kernel_size=(3,3,3),
    #           stride=(1,1,1), padding=(1,1,1), use_relu=True)
    N, Cin, D, H, W = 2, 4, 8, 8, 8
    Cout = 8
    ksize = (3, 3, 3)
    stride = (1, 1, 1)
    padding = (1, 1, 1)

    key = jax.random.PRNGKey(0)
    kx, kw_ = jax.random.split(key)

    # PyTorch gives x in NCDHW; build it that way, then transpose to NDHWC.
    x_ncdhw = jax.random.normal(kx, (N, Cin, D, H, W), jnp.float32)
    x_ndhwc = jnp.transpose(x_ncdhw, (0, 2, 3, 4, 1))

    # Conv3d weight (Cout, Cin, kd, kh, kw) -> DHWIO; deterministic init.
    w_torch = jax.random.normal(kw_, (Cout, Cin) + ksize, jnp.float32) * 0.1
    w_dhwio = jnp.transpose(w_torch, (2, 3, 4, 1, 0))

    # BatchNorm3d params: PyTorch default init gamma=1, beta=0.
    gamma = jnp.ones((Cout,), jnp.float32)
    beta = jnp.zeros((Cout,), jnp.float32)

    out = conv_block(x_ndhwc, w_dhwio, gamma, beta,
                     stride=stride, padding=padding, use_relu=True)
    out = jax.block_until_ready(out)

    ref = reference_conv_block(x_ndhwc, w_dhwio, gamma, beta,
                               stride, padding, use_relu=True)
    ref = jax.block_until_ready(ref)

    assert out.shape == ref.shape, (out.shape, ref.shape)
    # bf16 MXU operands (per perf review) vs an all-f32 reference -> tolerance
    # is deliberately loosened.
    err = float(jnp.max(jnp.abs(out.astype(jnp.float32) - ref.astype(jnp.float32))))
    assert err < 5e-2, err

    # TODO(synk): BatchNorm3d running_mean/running_var buffer updates (training
    # side effect) are not emitted; only the forward output is produced.
    print("KERNEL_OK")
</pallas_src>

<mosaic_0001>
module attributes {stable_mosaic.version = 11 : i64} {
  func.func @_stats_kernel(%arg0: i32, %arg1: memref<512x128xbf16, #tpu.memory_space<vmem>>, %arg2: memref<128x128xbf16, #tpu.memory_space<vmem>>, %arg3: memref<8x128xf32, #tpu.memory_space<vmem>>, %arg4: memref<8x128xf32, #tpu.memory_space<vmem>>) attributes {dimension_semantics = [#tpu.dimension_semantics<parallel>], iteration_bounds = array<i64: 2>, scalar_prefetch = 0 : i64, scratch_operands = 0 : i64, tpu.core_type = #tpu.core_type<tc>, window_params = [{transform_indices = @transform_0, window_bounds = array<i64: 512, 128>}, {pipeline_mode = #tpu.pipeline_mode<synchronous>, transform_indices = @transform_1, window_bounds = array<i64: 128, 128>}, {transform_indices = @transform_2, window_bounds = array<i64: 8, 128>}, {transform_indices = @transform_3, window_bounds = array<i64: 8, 128>}]} {
    %c0 = arith.constant 0 : index
    %c0_0 = arith.constant 0 : index
    %0 = vector.load %arg1[%c0, %c0_0] : memref<512x128xbf16, #tpu.memory_space<vmem>>, vector<512x128xbf16>
    %c0_1 = arith.constant 0 : index
    %c0_2 = arith.constant 0 : index
    %1 = vector.load %arg2[%c0_1, %c0_2] : memref<128x128xbf16, #tpu.memory_space<vmem>>, vector<128x128xbf16>
    %cst = arith.constant dense<0.000000e+00> : vector<512x128xf32>
    %2 = tpu.matmul %0, %1, %cst {dimension_numbers = #tpu.dot_dimension_numbers<[1], [0], [0], [1], [0, 0, 1, 1], [], []>} : vector<512x128xbf16>, vector<128x128xbf16>, vector<512x128xf32> -> vector<512x128xf32>
    %3 = vector.shape_cast %2 : vector<512x128xf32> to vector<64x8x128xf32>
    %cst_3 = arith.constant dense<0.000000e+00> : vector<8x128xf32>
    %4 = vector.multi_reduction <add>, %3, %cst_3 [0] : vector<64x8x128xf32> to vector<8x128xf32>
    %c0_4 = arith.constant 0 : index
    %c0_5 = arith.constant 0 : index
    %5 = vector.load %arg3[%c0_4, %c0_5] : memref<8x128xf32, #tpu.memory_space<vmem>>, vector<8x128xf32>
    tpu.vector_store %arg3[%c0_4, %c0_5], %4 {strides = array<i32>} : memref<8x128xf32, #tpu.memory_space<vmem>>, vector<8x128xf32>,
    %6 = arith.mulf %3, %3 : vector<64x8x128xf32>
    %cst_6 = arith.constant dense<0.000000e+00> : vector<8x128xf32>
    %7 = vector.multi_reduction <add>, %6, %cst_6 [0] : vector<64x8x128xf32> to vector<8x128xf32>
    %c0_7 = arith.constant 0 : index
    %c0_8 = arith.constant 0 : index
    %8 = vector.load %arg4[%c0_7, %c0_8] : memref<8x128xf32, #tpu.memory_space<vmem>>, vector<8x128xf32>
    tpu.vector_store %arg4[%c0_7, %c0_8], %7 {strides = array<i32>} : memref<8x128xf32, #tpu.memory_space<vmem>>, vector<8x128xf32>,
    return
  }
  func.func @transform_0(%arg0: i32) -> (i32, i32) {
    %c0_i32 = arith.constant 0 : i32
    %c0_i32_0 = arith.constant 0 : i32
    return %arg0, %c0_i32 : i32, i32
  }
  func.func @transform_1(%arg0: i32) -> (i32, i32) {
    %c0_i32 = arith.constant 0 : i32
    %c0_i32_0 = arith.constant 0 : i32
    %c0_i32_1 = arith.constant 0 : i32
    return %c0_i32, %c0_i32_0 : i32, i32
  }
  func.func @transform_2(%arg0: i32) -> (i32, i32) {
    %c0_i32 = arith.constant 0 : i32
    %c0_i32_0 = arith.constant 0 : i32
    return %arg0, %c0_i32 : i32, i32
  }
  func.func @transform_3(%arg0: i32) -> (i32, i32) {
    %c0_i32 = arith.constant 0 : i32
    %c0_i32_0 = arith.constant 0 : i32
    return %arg0, %c0_i32 : i32, i32
  }
}

</mosaic_0001>

<llo_original>
// kernel: tpu_custom_call.1
$region0: #{tpu_custom_call.1}
  #allocation0 [shape = 'u32[]', space=smem, size = 0x4, offset = 0x4, fixed_abs, tag = 'smem constant byte address 0x4 - core index']
  #allocation1 [shape = 'u32[144,128]{1,0:T(1,128)}', space=vmem, size = 0x12000, scoped, tag = 'internal scratch']
  %s0 = inlined_call_operand.hbm [shape: bf16[1024,128], index: 0, kind: input, shape index: {}]
  %s1 = inlined_call_operand.hbm [shape: bf16[128,128], index: 1, kind: input, shape index: {}]
  %s2 = inlined_call_operand.hbm [shape: f32[16,128], index: 2, kind: output, shape index: {0}]
  %s3 = inlined_call_operand.hbm [shape: f32[16,128], index: 3, kind: output, shape index: {1}]
  %4 = xla_tuple %s2, %s3
  %s5 = sld [smem:[#allocation0]]
  $region57: #{tpu_custom_call.1} parent=0
    _
  %s7 = ssub.s32 1, %s5
  %s8 = scalar_select 0, %s7, %s5
  $region1: #{tpu_custom_call.1} parent=0
    #allocation2 [shape = 'u8[262144]{0}', space=vmem, size = 0x40000, scoped, tag = 'input window, operand 0']
    #allocation3 [shape = 's32[2]{0}', space=sflag, size = 0x8, scoped, tag = 'scoped memory for tpu_custom_call.1']
    #allocation4 [shape = 's32[2]{0}', space=sflag, size = 0x8, scoped, tag = 'scoped memory for tpu_custom_call.1']
    #allocation5 [shape = 'u8[32768]{0}', space=vmem, size = 0x8000, scoped, tag = 'input window, operand 1, single buffered']
    #allocation6 [shape = 's32[1]{0}', space=sflag, size = 0x4, scoped, tag = 'scoped memory for tpu_custom_call.1']
    #allocation7 [shape = 'u8[8192]{0}', space=vmem, size = 0x2000, scoped, tag = 'output window, operand 0']
    #allocation8 [shape = 'u8[8192]{0}', space=vmem, size = 0x2000, scoped, tag = 'output window, operand 1']
    #allocation9 [shape = 's32[2]{0}', space=sflag, size = 0x8, scoped, tag = 'scoped memory for tpu_custom_call.1']
    %9 = vsyncpa [#allocation3], 0
    %s10 = scalar_lea.sflag [#allocation3], 1
    %11 = vsyncpa %s10, 0
    %12 = vsyncpa [#allocation6], 0
    %13 = vsyncpa [#allocation4], 0
    %s14 = scalar_lea.sflag [#allocation4], 1
    %15 = vsyncpa %s14, 0
    %16 = vsyncpa [#allocation9], 0
    %s17 = scalar_lea.sflag [#allocation9], 1
    %18 = vsyncpa %s17, 0
    loop: start=0, step=1, limit=4
    $region2: #{tpu_custom_call.1} parent=1 // loop_pre_header
      _
    $region3: #{tpu_custom_call.1} parent=1 // loop_header
      %s20 = sphi 0, %s24
      %p21 = scmp.ge.s32.totalorder %s20, 4
      %s30 = sphi 0, %s32
      %s33 = sphi 0, %s30
      %s34 = sphi 0, %s33
      %s50 = sphi 0, %s34
      %s54 = sphi 0, %s54
      %s56 = sphi 0, %s54
      %s57 = sphi 0, %s56
      %s71 = sphi 0, %s57
      %s77 = sphi 0, %s79
      %s80 = sphi 0, %s77
      %s81 = sphi 0, %s80
      %s97 = sphi 0, %s81
      %s103 = sphi 0, %s105
      %s106 = sphi 0, %s103
      %s107 = sphi 0, %s106
      %s123 = sphi 0, %s107
    $region4: #{tpu_custom_call.1} parent=1 // loop_header_branch
      %23 = sbr.rel (%p21) target = $region8
    $region5: #{tpu_custom_call.1} parent=1 // loop_body
      %s25 = ssub.s32 %s20, 1
      %s26 = ssub.s32 %s20, 2
      %s27 = sadd.s32 %s20, 1
      %s28 = ssub.s32 %s20, %s27
      %p29 = scmp.eq.s32.totalorder %s28, 0
      %s31 = sadd.s32 %s30, 1
      %s32 = scalar_select %p29, %s30, %s31
      %p35 = pneg %p29
      %p36 = scmp.eq.s32.totalorder %s20, 1
      %p37 = por %p35, %p36
      %p38 = scmp.ne.s32.totalorder %s30, %s33
      %p39 = scmp.eq.s32.totalorder %s20, 0
      %p40 = por %p38, %p39
      %p41 = scmp.ne.s32.totalorder %s30, %s33
      %p42 = scmp.eq.s32.totalorder %s25, 1
      %p43 = por %p41, %p42
      %p44 = scmp.ne.s32.totalorder %s33, %s34
      %p45 = scmp.eq.s32.totalorder %s25, 0
      %p46 = por %p44, %p45
      %p47 = scmp.ne.s32.totalorder %s33, %s34
      %p48 = scmp.eq.s32.totalorder %s26, 1
      %p49 = por %p47, %p48
      %p51 = scmp.ne.s32.totalorder %s34, %s50
      %p52 = scmp.eq.s32.totalorder %s26, 0
      %p53 = por %p51, %p52
      %s55 = sadd.s32 %s54, 1
      %p58 = scmp.eq.s32.totalorder %s20, 1
      %p59 = scmp.ne.s32.totalorder %s54, %s56
      %p60 = scmp.eq.s32.totalorder %s20, 0
      %p61 = por %p59, %p60
      %p62 = scmp.ne.s32.totalorder %s54, %s56
      %p63 = scmp.eq.s32.totalorder %s25, 1
      %p64 = por %p62, %p63
      %p65 = scmp.ne.s32.totalorder %s56, %s57
      %p66 = scmp.eq.s32.totalorder %s25, 0
      %p67 = por %p65, %p66
      %p68 = scmp.ne.s32.totalorder %s56, %s57
      %p69 = scmp.eq.s32.totalorder %s26, 1
      %p70 = por %p68, %p69
      %p72 = scmp.ne.s32.totalorder %s57, %s71
      %p73 = scmp.eq.s32.totalorder %s26, 0
      %p74 = por %p72, %p73
      %s75 = ssub.s32 %s20, %s27
      %p76 = scmp.eq.s32.totalorder %s75, 0
      %s78 = sadd.s32 %s77, 1
      %s79 = scalar_select %p76, %s77, %s78
      %p82 = pneg %p76
      %p83 = scmp.eq.s32.totalorder %s20, 1
      %p84 = por %p82, %p83
      %p85 = scmp.ne.s32.totalorder %s77, %s80
      %p86 = scmp.eq.s32.totalorder %s20, 0
      %p87 = por %p85, %p86
      %p88 = scmp.ne.s32.totalorder %s77, %s80
      %p89 = scmp.eq.s32.totalorder %s25, 1
      %p90 = por %p88, %p89
      %p91 = scmp.ne.s32.totalorder %s80, %s81
      %p92 = scmp.eq.s32.totalorder %s25, 0
      %p93 = por %p91, %p92
      %p94 = scmp.ne.s32.totalorder %s80, %s81
      %p95 = scmp.eq.s32.totalorder %s26, 1
      %p96 = por %p94, %p95
      %p98 = scmp.ne.s32.totalorder %s81, %s97
      %p99 = scmp.eq.s32.totalorder %s26, 0
      %p100 = por %p98, %p99
      %s101 = ssub.s32 %s20, %s27
      %p102 = scmp.eq.s32.totalorder %s101, 0
      %s104 = sadd.s32 %s103, 1
      %s105 = scalar_select %p102, %s103, %s104
      %p108 = pneg %p102
      %p109 = scmp.eq.s32.totalorder %s20, 1
      %p110 = por %p108, %p109
      %p111 = scmp.ne.s32.totalorder %s103, %s106
      %p112 = scmp.eq.s32.totalorder %s20, 0
      %p113 = por %p111, %p112
      %p114 = scmp.ne.s32.totalorder %s103, %s106
      %p115 = scmp.eq.s32.totalorder %s25, 1
      %p116 = por %p114, %p115
      %p117 = scmp.ne.s32.totalorder %s106, %s107
      %p118 = scmp.eq.s32.totalorder %s25, 0
      %p119 = por %p117, %p118
      %p120 = scmp.ne.s32.totalorder %s106, %s107
      %p121 = scmp.eq.s32.totalorder %s26, 1
      %p122 = por %p120, %p121
      %p124 = scmp.ne.s32.totalorder %s107, %s123
      %p125 = scmp.eq.s32.totalorder %s26, 0
      %p126 = por %p124, %p125
      %p127 = scmp.le.s32.totalorder 1, %s20
      %p128 = scmp.lt.s32.totalorder %s20, 3
      %p129 = pnand %p127, %p128
      %p130 = pneg %p129
      // Predicated region
      $region9: #{tpu_custom_call.1} parent=5 // pred_check
        _
      $region10: #{tpu_custom_call.1} parent=5 // pred_check_branch
        %132 = sbr.rel (%p129) target = $region12
      $region11: #{tpu_custom_call.1} parent=5 // pred_region
        %s133 = ssub.s32 %s20, 1
        // Predicated region
        $region13: #{tpu_custom_call.1} parent=11 // pred_check
          %p134 = pneg %p67
        $region14: #{tpu_custom_call.1} parent=11 // pred_check_branch
          %136 = sbr.rel (%p134) target = $region16
        $region15: #{tpu_custom_call.1} parent=11 // pred_region
          %s138 = ssub.s32 1024, 1024
          %139 = vsyncadd [#allocation6], %s138
          %s140 = sshll.u32 [#allocation5], 4
          %s141 = int_to_ptr.vmem [resolvable:$true] %s140
          %146 = dma.hbm_to_vmem [thread:$0]  %s1, 1024, %s141, [#allocation6], 64, 64, 4
        $region16: #{tpu_custom_call.1} parent=11 // pred_fallthru
          _
      $region12: #{tpu_custom_call.1} parent=5 // pred_fallthru
        _
      %p147 = scmp.lt.s32.totalorder %s20, 2
      // Predicated region
      $region17: #{tpu_custom_call.1} parent=5 // pred_check
        %p148 = pneg %p147
      $region18: #{tpu_custom_call.1} parent=5 // pred_check_branch
        %150 = sbr.rel (%p148) target = $region20
      $region19: #{tpu_custom_call.1} parent=5 // pred_region
        // Predicated region
        $region21: #{tpu_custom_call.1} parent=19 // pred_check
          %p151 = pneg %p40
        $region22: #{tpu_custom_call.1} parent=19 // pred_check_branch
          %153 = sbr.rel (%p151) target = $region24
        $region23: #{tpu_custom_call.1} parent=19 // pred_region
          %s154 = sand.u32 %s30, 1
          %s155 = scalar_lea.sflag [#allocation3], %s154
          %s156 = sand.u32 %s30, 1
          %s157 = smul.addr %s156, 256
          %s158 = scalar_lea.vmem [#allocation2], %s157
          %s159 = smul.u32 64, %s20
          %s161 = ssub.s32 4096, 4096
          %162 = vsyncadd %s155, %s161
          %s163 = smul.addr %s159, 64
          %s164 = scalar_lea.hbm %s0, %s163
          %s165 = sshll.u32 %s158, 4
          %s166 = int_to_ptr.vmem [resolvable:$true] %s165
          %171 = dma.hbm_to_vmem [thread:$0]  %s164, 4096, %s166, %s155, 64, 64, 4
        $region24: #{tpu_custom_call.1} parent=19 // pred_fallthru
          _
      $region20: #{tpu_custom_call.1} parent=5 // pred_fallthru
        _
      %p172 = scmp.le.s32.totalorder 1, %s20
      %p173 = scmp.lt.s32.totalorder %s20, 3
      %p174 = pnand %p172, %p173
      %p175 = pneg %p174
      // Predicated region
      $region25: #{tpu_custom_call.1} parent=5 // pred_check
        _
      $region26: #{tpu_custom_call.1} parent=5 // pred_check_branch
        %177 = sbr.rel (%p174) target = $region28
      $region27: #{tpu_custom_call.1} parent=5 // pred_region
        %s178 = ssub.s32 %s20, 1
        %s179 = sand.u32 %s33, 1
        %s180 = scalar_lea.sflag [#allocation3], %s179
        %s181 = sand.u32 %s33, 1
        %s182 = smul.addr %s181, 256
        %s183 = scalar_lea.vmem [#allocation2], %s182
        // Predicated region
        $region29: #{tpu_custom_call.1} parent=27 // pred_check
          %p184 = pneg %p46
        $region30: #{tpu_custom_call.1} parent=27 // pred_check_branch
          %186 = sbr.rel (%p184) target = $region32
        $region31: #{tpu_custom_call.1} parent=27 // pred_region
          %187 = dma.done %s180, 4096
        $region32: #{tpu_custom_call.1} parent=27 // pred_fallthru
          _
        // Predicated region
        $region33: #{tpu_custom_call.1} parent=27 // pred_check
          %p188 = pneg %p67
        $region34: #{tpu_custom_call.1} parent=27 // pred_check_branch
          %190 = sbr.rel (%p188) target = $region36
        $region35: #{tpu_custom_call.1} parent=27 // pred_region
          %191 = dma.done [#allocation6], 1024
        $region36: #{tpu_custom_call.1} parent=27 // pred_fallthru
          _
        %s192 = sand.u32 %s33, 1
        %s193 = scalar_lea.sflag [#allocation3], %s192
        %s194 = sand.u32 %s33, 1
        %s195 = smul.addr %s194, 256
        %s196 = scalar_lea.vmem [#allocation2], %s195
        %p197 = pneg %p46
        %p198 = pneg %p43
        %p199 = pneg %p67
        %p200 = pneg %p64
        %p201 = pneg %p93
        %p202 = pneg %p90
        %s203 = sand.u32 %s80, 1
        %s204 = scalar_lea.sflag [#allocation4], %s203
        %s205 = sand.u32 %s80, 1
        %s206 = smul.addr %s205, 8
        %s207 = scalar_lea.vmem [#allocation7], %s206
        %p208 = pneg %p119
        %p209 = pneg %p116
        %s210 = sand.u32 %s106, 1
        %s211 = scalar_lea.sflag [#allocation9], %s210
        %s212 = sand.u32 %s106, 1
        %s213 = smul.addr %s212, 8
        %s214 = scalar_lea.vmem [#allocation8], %s213
        %s215 = smul.u32 64, %s25
        %v217 = vld [vmem:[%s183] sm:$0xf]
        %v218 = vld [vmem:[%s183 + $0x4] sm:$0xf]
        %v219 = vld [vmem:[%s183 + $0x8] sm:$0xf]
        %v220 = vld [vmem:[%s183 + $0xc] sm:$0xf]
        %v221 = vld [vmem:[%s183 + $0x10] sm:$0xf]
        %v222 = vld [vmem:[%s183 + $0x14] sm:$0xf]
        %v223 = vld [vmem:[%s183 + $0x18] sm:$0xf]
        %v224 = vld [vmem:[%s183 + $0x1c] sm:$0xf]
        %v225 = vld [vmem:[%s183 + $0x20] sm:$0xf]
        %v226 = vld [vmem:[%s183 + $0x24] sm:$0xf]
        %v227 = vld [vmem:[%s183 + $0x28] sm:$0xf]
        %v228 = vld [vmem:[%s183 + $0x2c] sm:$0xf]
        %v229 = vld [vmem:[%s183 + $0x30] sm:$0xf]
        %v230 = vld [vmem:[%s183 + $0x34] sm:$0xf]
        %v231 = vld [vmem:[%s183 + $0x38] sm:$0xf]
        %v232 = vld [vmem:[%s183 + $0x3c] sm:$0xf]
        %v233 = vld [vmem:[%s183 + $0x40] sm:$0xf]
        %v234 = vld [vmem:[%s183 + $0x44] sm:$0xf]
        %v235 = vld [vmem:[%s183 + $0x48] sm:$0xf]
        %v236 = vld [vmem:[%s183 + $0x4c] sm:$0xf]
        %v237 = vld [vmem:[%s183 + $0x50] sm:$0xf]
        %v238 = vld [vmem:[%s183 + $0x54] sm:$0xf]
        %v239 = vld [vmem:[%s183 + $0x58] sm:$0xf]
        %v240 = vld [vmem:[%s183 + $0x5c] sm:$0xf]
        %v241 = vld [vmem:[%s183 + $0x60] sm:$0xf]
        %v242 = vld [vmem:[%s183 + $0x64] sm:$0xf]
        %v243 = vld [vmem:[%s183 + $0x68] sm:$0xf]
        %v244 = vld [vmem:[%s183 + $0x6c] sm:$0xf]
        %v245 = vld [vmem:[%s183 + $0x70] sm:$0xf]
        %v246 = vld [vmem:[%s183 + $0x74] sm:$0xf]
        %v247 = vld [vmem:[%s183 + $0x78] sm:$0xf]
        %v248 = vld [vmem:[%s183 + $0x7c] sm:$0xf]
        %v249 = vld [vmem:[%s183 + $0x80] sm:$0xf]
        %v250 = vld [vmem:[%s183 + $0x84] sm:$0xf]
        %v251 = vld [vmem:[%s183 + $0x88] sm:$0xf]
        %v252 = vld [vmem:[%s183 + $0x8c] sm:$0xf]
        %v253 = vld [vmem:[%s183 + $0x90] sm:$0xf]
        %v254 = vld [vmem:[%s183 + $0x94] sm:$0xf]
        %v255 = vld [vmem:[%s183 + $0x98] sm:$0xf]
        %v256 = vld [vmem:[%s183 + $0x9c] sm:$0xf]
        %v257 = vld [vmem:[%s183 + $0xa0] sm:$0xf]
        %v258 = vld [vmem:[%s183 + $0xa4] sm:$0xf]
        %v259 = vld [vmem:[%s183 + $0xa8] sm:$0xf]
        %v260 = vld [vmem:[%s183 + $0xac] sm:$0xf]
        %v261 = vld [vmem:[%s183 + $0xb0] sm:$0xf]
        %v262 = vld [vmem:[%s183 + $0xb4] sm:$0xf]
        %v263 = vld [vmem:[%s183 + $0xb8] sm:$0xf]
        %v264 = vld [vmem:[%s183 + $0xbc] sm:$0xf]
        %v265 = vld [vmem:[%s183 + $0xc0] sm:$0xf]
        %v266 = vld [vmem:[%s183 + $0xc4] sm:$0xf]
        %v267 = vld [vmem:[%s183 + $0xc8] sm:$0xf]
        %v268 = vld [vmem:[%s183 + $0xcc] sm:$0xf]
        %v269 = vld [vmem:[%s183 + $0xd0] sm:$0xf]
        %v270 = vld [vmem:[%s183 + $0xd4] sm:$0xf]
        %v271 = vld [vmem:[%s183 + $0xd8] sm:$0xf]
        %v272 = vld [vmem:[%s183 + $0xdc] sm:$0xf]
        %v273 = vld [vmem:[%s183 + $0xe0] sm:$0xf]
        %v274 = vld [vmem:[%s183 + $0xe4] sm:$0xf]
        %v275 = vld [vmem:[%s183 + $0xe8] sm:$0xf]
        %v276 = vld [vmem:[%s183 + $0xec] sm:$0xf]
        %v277 = vld [vmem:[%s183 + $0xf0] sm:$0xf]
        %v278 = vld [vmem:[%s183 + $0xf4] sm:$0xf]
        %v279 = vld [vmem:[%s183 + $0xf8] sm:$0xf]
        %v280 = vld [vmem:[%s183 + $0xfc] sm:$0xf]
        %v281 = vld [vmem:[#allocation5] sm:$0xf]
        %v282 = vld [vmem:[#allocation5 + $0x4] sm:$0xf]
        %v283 = vld [vmem:[#allocation5 + $0x8] sm:$0xf]
        %v284 = vld [vmem:[#allocation5 + $0xc] sm:$0xf]
        %v285 = vld [vmem:[#allocation5 + $0x10] sm:$0xf]
        %v286 = vld [vmem:[#allocation5 + $0x14] sm:$0xf]
        %v287 = vld [vmem:[#allocation5 + $0x18] sm:$0xf]
        %v288 = vld [vmem:[#allocation5 + $0x1c] sm:$0xf]
        %v289 = vld [vmem:[#allocation5 + $0x20] sm:$0xf]
        %v290 = vld [vmem:[#allocation5 + $0x24] sm:$0xf]
        %v291 = vld [vmem:[#allocation5 + $0x28] sm:$0xf]
        %v292 = vld [vmem:[#allocation5 + $0x2c] sm:$0xf]
        %v293 = vld [vmem:[#allocation5 + $0x30] sm:$0xf]
        %v294 = vld [vmem:[#allocation5 + $0x34] sm:$0xf]
        %v295 = vld [vmem:[#allocation5 + $0x38] sm:$0xf]
        %v296 = vld [vmem:[#allocation5 + $0x3c] sm:$0xf]
        %v361 = vunpack.c.l.b16 %v217
        %v362 = vunpack.c.l.b16 %v218
        %v363 = vunpack.c.l.b16 %v219
        %v364 = vunpack.c.l.b16 %v220
        %v365 = vunpack.c.l.b16 %v221
        %v366 = vunpack.c.l.b16 %v222
        %v367 = vunpack.c.l.b16 %v223
        %v368 = vunpack.c.l.b16 %v224
        %v369 = vunpack.c.l.b16 %v225
        %v370 = vunpack.c.l.b16 %v226
        %v371 = vunpack.c.l.b16 %v227
        %v372 = vunpack.c.l.b16 %v228
        %v373 = vunpack.c.l.b16 %v229
        %v374 = vunpack.c.l.b16 %v230
        %v375 = vunpack.c.l.b16 %v231
        %v376 = vunpack.c.l.b16 %v232
        %v377 = vunpack.c.l.b16 %v233
        %v378 = vunpack.c.l.b16 %v234
        %v379 = vunpack.c.l.b16 %v235
        %v380 = vunpack.c.l.b16 %v236
        %v381 = vunpack.c.l.b16 %v237
        %v382 = vunpack.c.l.b16 %v238
        %v383 = vunpack.c.l.b16 %v239
        %v384 = vunpack.c.l.b16 %v240
        %v385 = vunpack.c.l.b16 %v241
        %v386 = vunpack.c.l.b16 %v242
        %v387 = vunpack.c.l.b16 %v243
        %v388 = vunpack.c.l.b16 %v244
        %v389 = vunpack.c.l.b16 %v245
        %v390 = vunpack.c.l.b16 %v246
        %v391 = vunpack.c.l.b16 %v247
        %v392 = vunpack.c.l.b16 %v248
        %v393 = vunpack.c.l.b16 %v249
        %v394 = vunpack.c.l.b16 %v250
        %v395 = vunpack.c.l.b16 %v251
        %v396 = vunpack.c.l.b16 %v252
        %v397 = vunpack.c.l.b16 %v253
        %v398 = vunpack.c.l.b16 %v254
        %v399 = vunpack.c.l.b16 %v255
        %v400 = vunpack.c.l.b16 %v256
        %v401 = vunpack.c.l.b16 %v257
        %v402 = vunpack.c.l.b16 %v258
        %v403 = vunpack.c.l.b16 %v259
        %v404 = vunpack.c.l.b16 %v260
        %v405 = vunpack.c.l.b16 %v261
        %v406 = vunpack.c.l.b16 %v262
        %v407 = vunpack.c.l.b16 %v263
        %v408 = vunpack.c.l.b16 %v264
        %v409 = vunpack.c.l.b16 %v265
        %v410 = vunpack.c.l.b16 %v266
        %v411 = vunpack.c.l.b16 %v267
        %v412 = vunpack.c.l.b16 %v268
        %v413 = vunpack.c.l.b16 %v269
        %v414 = vunpack.c.l.b16 %v270
        %v415 = vunpack.c.l.b16 %v271
        %v416 = vunpack.c.l.b16 %v272
        %v417 = vunpack.c.l.b16 %v273
        %v418 = vunpack.c.l.b16 %v274
        %v419 = vunpack.c.l.b16 %v275
        %v420 = vunpack.c.l.b16 %v276
        %v421 = vunpack.c.l.b16 %v277
        %v422 = vunpack.c.l.b16 %v278
        %v423 = vunpack.c.l.b16 %v279
        %v424 = vunpack.c.l.b16 %v280
        %v425 = vpack.c.b16 %v362, %v361
        %v426 = vpack.c.b16 %v364, %v363
        %v427 = vpack.c.b16 %v366, %v365
        %v428 = vpack.c.b16 %v368, %v367
        %v429 = vpack.c.b16 %v370, %v369
        %v430 = vpack.c.b16 %v372, %v371
        %v431 = vpack.c.b16 %v374, %v373
        %v432 = vpack.c.b16 %v376, %v375
        %v433 = vpack.c.b16 %v378, %v377
        %v434 = vpack.c.b16 %v380, %v379
        %v435 = vpack.c.b16 %v382, %v381
        %v436 = vpack.c.b16 %v384, %v383
        %v437 = vpack.c.b16 %v386, %v385
        %v438 = vpack.c.b16 %v388, %v387
        %v439 = vpack.c.b16 %v390, %v389
        %v440 = vpack.c.b16 %v392, %v391
        %v441 = vpack.c.b16 %v394, %v393
        %v442 = vpack.c.b16 %v396, %v395
        %v443 = vpack.c.b16 %v398, %v397
        %v444 = vpack.c.b16 %v400, %v399
        %v445 = vpack.c.b16 %v402, %v401
        %v446 = vpack.c.b16 %v404, %v403
        %v447 = vpack.c.b16 %v406, %v405
        %v448 = vpack.c.b16 %v408, %v407
        %v449 = vpack.c.b16 %v410, %v409
        %v450 = vpack.c.b16 %v412, %v411
        %v451 = vpack.c.b16 %v414, %v413
        %v452 = vpack.c.b16 %v416, %v415
        %v453 = vpack.c.b16 %v418, %v417
        %v454 = vpack.c.b16 %v420, %v419
        %v455 = vpack.c.b16 %v422, %v421
        %v456 = vpack.c.b16 %v424, %v423
        %v505 = vunpack.c.l.b16 %v281
        %v506 = vunpack.c.l.b16 %v282
        %v507 = vunpack.c.l.b16 %v283
        %v508 = vunpack.c.l.b16 %v284
        %v509 = vunpack.c.l.b16 %v285
        %v510 = vunpack.c.l.b16 %v286
        %v511 = vunpack.c.l.b16 %v287
        %v512 = vunpack.c.l.b16 %v288
        %v513 = vunpack.c.l.b16 %v289
        %v514 = vunpack.c.l.b16 %v290
        %v515 = vunpack.c.l.b16 %v291
        %v516 = vunpack.c.l.b16 %v292
        %v517 = vunpack.c.l.b16 %v293
        %v518 = vunpack.c.l.b16 %v294
        %v519 = vunpack.c.l.b16 %v295
        %v520 = vunpack.c.l.b16 %v296
        %v521 = vpack.c.b16 %v506, %v505
        %v522 = vpack.c.b16 %v508, %v507
        %v523 = vpack.c.b16 %v510, %v509
        %v524 = vpack.c.b16 %v512, %v511
        %v525 = vpack.c.b16 %v514, %v513
        %v526 = vpack.c.b16 %v516, %v515
        %v527 = vpack.c.b16 %v518, %v517
        %v528 = vpack.c.b16 %v520, %v519
        %537 = vmatprep.subr.bf16.mxu0 0
        %538 = vmatpush1.bf16.msra.mxu0 %v521
        %539 = vmatprep.subr.bf16.mxu0 0
        %540 = vmatpush1.bf16.msra.mxu0 %v522
        %541 = vmatprep.subr.bf16.mxu0 0
        %542 = vmatpush1.bf16.msra.mxu0 %v523
        %543 = vmatprep.subr.bf16.mxu0 0
        %544 = vmatpush1.bf16.msra.mxu0 %v524
        %545 = vmatprep.subr.bf16.mxu0 0
        %546 = vmatpush1.bf16.msra.mxu0 %v525
        %547 = vmatprep.subr.bf16.mxu0 0
        %548 = vmatpush1.bf16.msra.mxu0 %v526
        %549 = vmatprep.subr.bf16.mxu0 0
        %550 = vmatpush1.bf16.msra.mxu0 %v527
        %551 = vmatprep.subr.bf16.mxu0 0
        %552 = vmatpush1.bf16.msra.mxu0 %v528
        %553 = vmatprep.subr.bf16.mxu0 0
        %554 = vmatpush1.bf16.msra.mxu0 0
        %555 = vmatprep.subr.bf16.mxu0 0
        %556 = vmatpush1.bf16.msra.mxu0 0
        %557 = vmatprep.subr.bf16.mxu0 0
        %558 = vmatpush1.bf16.msra.mxu0 0
        %559 = vmatprep.subr.bf16.mxu0 0
        %560 = vmatpush1.bf16.msra.mxu0 0
        %561 = vmatprep.subr.bf16.mxu0 0
        %562 = vmatpush1.bf16.msra.mxu0 0
        %563 = vmatprep.subr.bf16.mxu0 0
        %564 = vmatpush1.bf16.msra.mxu0 0
        %565 = vmatprep.subr.bf16.mxu0 0
        %566 = vmatpush1.bf16.msra.mxu0 0
        %567 = vmatprep.subr.bf16.mxu0 0
        %568 = vmatpush1.bf16.msra.mxu0 0
        %569 = vmatprep.mubr.bf16.mxu0 0
        %570 = vmatmul.mubr.bf16.gmra.mrb[0].mxu0 %v425
        %v571 = vpop.f32.mrb[0].mxu0
        %v572 = vadd.f32 0.0, %v571
        %v573 = vpop.f32.mrb[0].mxu0
        %v574 = vpop.f32.mrb[0].mxu0
        %v575 = vadd.f32 0.0, %v574
        %v576 = vpop.f32.mrb[0].mxu0
        %577 = vmatprep.mubr.bf16.mxu0 0
        %578 = vmatmul.mubr.bf16.gmra.mrb[0].mxu0 %v426
        %v579 = vpop.f32.mrb[0].mxu0
        %v580 = vadd.f32 0.0, %v579
        %v581 = vpop.f32.mrb[0].mxu0
        %v582 = vpop.f32.mrb[0].mxu0
        %v583 = vadd.f32 0.0, %v582
        %v584 = vpop.f32.mrb[0].mxu0
        %585 = vmatprep.mubr.bf16.mxu0 0
        %586 = vmatmul.mubr.bf16.gmra.mrb[0].mxu0 %v427
        %v587 = vpop.f32.mrb[0].mxu0
        %v588 = vadd.f32 0.0, %v587
        %v589 = vpop.f32.mrb[0].mxu0
        %v590 = vpop.f32.mrb[0].mxu0
        %v591 = vadd.f32 0.0, %v590
        %v592 = vpop.f32.mrb[0].mxu0
        %593 = vmatprep.mubr.bf16.mxu0 0
        %594 = vmatmul.mubr.bf16.gmra.mrb[0].mxu0 %v428
        %v595 = vpop.f32.mrb[0].mxu0
        %v596 = vadd.f32 0.0, %v595
        %v597 = vpop.f32.mrb[0].mxu0
        %v598 = vpop.f32.mrb[0].mxu0
        %v599 = vadd.f32 0.0, %v598
        %v600 = vpop.f32.mrb[0].mxu0
        %601 = vmatprep.mubr.bf16.mxu0 0
        %602 = vmatmul.mubr.bf16.gmra.mrb[0].mxu0 %v429
        %v603 = vpop.f32.mrb[0].mxu0
        %v604 = vadd.f32 0.0, %v603
        %v605 = vpop.f32.mrb[0].mxu0
        %v606 = vpop.f32.mrb[0].mxu0
        %v607 = vadd.f32 0.0, %v606
        %v608 = vpop.f32.mrb[0].mxu0
        %609 = vmatprep.mubr.bf16.mxu0 0
        %610 = vmatmul.mubr.bf16.gmra.mrb[0].mxu0 %v430
        %v611 = vpop.f32.mrb[0].mxu0
        %v612 = vadd.f32 0.0, %v611
        %v613 = vpop.f32.mrb[0].mxu0
        %v614 = vpop.f32.mrb[0].mxu0
        %v615 = vadd.f32 0.0, %v614
        %v616 = vpop.f32.mrb[0].mxu0
        %617 = vmatprep.mubr.bf16.mxu0 0
        %618 = vmatmul.mubr.bf16.gmra.mrb[0].mxu0 %v431
        %v619 = vpop.f32.mrb[0].mxu0
        %v620 = vadd.f32 0.0, %v619
        %v621 = vpop.f32.mrb[0].mxu0
        %v622 = vpop.f32.mrb[0].mxu0
        %v623 = vadd.f32 0.0, %v622
        %v624 = vpop.f32.mrb[0].mxu0
        %625 = vmatprep.mubr.bf16.mxu0 0
        %626 = vmatmul.mubr.bf16.gmra.mrb[0].mxu0 %v432
        %v627 = vpop.f32.mrb[0].mxu0
        %v628 = vadd.f32 0.0, %v627
        %v629 = vpop.f32.mrb[0].mxu0
        %v630 = vpop.f32.mrb[0].mxu0
        %v631 = vadd.f32 0.0, %v630
        %v632 = vpop.f32.mrb[0].mxu0
        %633 = vmatprep.mubr.bf16.mxu0 0
        %634 = vmatmul.mubr.bf16.gmra.mrb[0].mxu0 %v433
        %v635 = vpop.f32.mrb[0].mxu0
        %v636 = vadd.f32 0.0, %v635
        %v637 = vpop.f32.mrb[0].mxu0
        %v638 = vpop.f32.mrb[0].mxu0
        %v639 = vadd.f32 0.0, %v638
        %v640 = vpop.f32.mrb[0].mxu0
        %641 = vmatprep.mubr.bf16.mxu0 0
        %642 = vmatmul.mubr.bf16.gmra.mrb[0].mxu0 %v434
        %v643 = vpop.f32.mrb[0].mxu0
        %v644 = vadd.f32 0.0, %v643
        %v645 = vpop.f32.mrb[0].mxu0
        %v646 = vpop.f32.mrb[0].mxu0
        %v647 = vadd.f32 0.0, %v646
        %v648 = vpop.f32.mrb[0].mxu0
        %649 = vmatprep.mubr.bf16.mxu0 0
        %650 = vmatmul.mubr.bf16.gmra.mrb[0].mxu0 %v435
        %v651 = vpop.f32.mrb[0].mxu0
        %v652 = vadd.f32 0.0, %v651
        %v653 = vpop.f32.mrb[0].mxu0
        %v654 = vpop.f32.mrb[0].mxu0
        %v655 = vadd.f32 0.0, %v654
        %v656 = vpop.f32.mrb[0].mxu0
        %657 = vmatprep.mubr.bf16.mxu0 0
        %658 = vmatmul.mubr.bf16.gmra.mrb[0].mxu0 %v436
        %v659 = vpop.f32.mrb[0].mxu0
        %v660 = vadd.f32 0.0, %v659
        %v661 = vpop.f32.mrb[0].mxu0
        %v662 = vpop.f32.mrb[0].mxu0
        %v663 = vadd.f32 0.0, %v662
        %v664 = vpop.f32.mrb[0].mxu0
        %665 = vmatprep.mubr.bf16.mxu0 0
        %666 = vmatmul.mubr.bf16.gmra.mrb[0].mxu0 %v437
        %v667 = vpop.f32.mrb[0].mxu0
        %v668 = vadd.f32 0.0, %v667
        %v669 = vpop.f32.mrb[0].mxu0
        %v670 = vpop.f32.mrb[0].mxu0
        %v671 = vadd.f32 0.0, %v670
        %v672 = vpop.f32.mrb[0].mxu0
        %673 = vmatprep.mubr.bf16.mxu0 0
        %674 = vmatmul.mubr.bf16.gmra.mrb[0].mxu0 %v438
        %v675 = vpop.f32.mrb[0].mxu0
        %v676 = vadd.f32 0.0, %v675
        %v677 = vpop.f32.mrb[0].mxu0
        %v678 = vpop.f32.mrb[0].mxu0
        %v679 = vadd.f32 0.0, %v678
        %v680 = vpop.f32.mrb[0].mxu0
        %681 = vmatprep.mubr.bf16.mxu0 0
        %682 = vmatmul.mubr.bf16.gmra.mrb[0].mxu0 %v439
        %v683 = vpop.f32.mrb[0].mxu0
        %v684 = vadd.f32 0.0, %v683
        %v685 = vpop.f32.mrb[0].mxu0
        %v686 = vpop.f32.mrb[0].mxu0
        %v687 = vadd.f32 0.0, %v686
        %v688 = vpop.f32.mrb[0].mxu0
        %689 = vmatprep.mubr.bf16.mxu0 0
        %690 = vmatmul.mubr.bf16.gmra.mrb[0].mxu0 %v440
        %v691 = vpop.f32.mrb[0].mxu0
        %v692 = vadd.f32 0.0, %v691
        %v693 = vpop.f32.mrb[0].mxu0
        %v694 = vpop.f32.mrb[0].mxu0
        %v695 = vadd.f32 0.0, %v694
        %v696 = vpop.f32.mrb[0].mxu0
        %697 = vmatprep.mubr.bf16.mxu0 0
        %698 = vmatmul.mubr.bf16.gmra.mrb[0].mxu0 %v441
        %v699 = vpop.f32.mrb[0].mxu0
        %v700 = vadd.f32 0.0, %v699
        %v701 = vpop.f32.mrb[0].mxu0
        %v702 = vpop.f32.mrb[0].mxu0
        %v703 = vadd.f32 0.0, %v702
        %v704 = vpop.f32.mrb[0].mxu0
        %705 = vmatprep.mubr.bf16.mxu0 0
        %706 = vmatmul.mubr.bf16.gmra.mrb[0].mxu0 %v442
        %v707 = vpop.f32.mrb[0].mxu0
        %v708 = vadd.f32 0.0, %v707
        %v709 = vpop.f32.mrb[0].mxu0
        %v710 = vpop.f32.mrb[0].mxu0
        %v711 = vadd.f32 0.0, %v710
        %v712 = vpop.f32.mrb[0].mxu0
        %713 = vmatprep.mubr.bf16.mxu0 0
        %714 = vmatmul.mubr.bf16.gmra.mrb[0].mxu0 %v443
        %v715 = vpop.f32.mrb[0].mxu0
        %v716 = vadd.f32 0.0, %v715
        %v717 = vpop.f32.mrb[0].mxu0
        %v718 = vpop.f32.mrb[0].mxu0
        %v719 = vadd.f32 0.0, %v718
        %v720 = vpop.f32.mrb[0].mxu0
        %721 = vmatprep.mubr.bf16.mxu0 0
        %722 = vmatmul.mubr.bf16.gmra.mrb[0].mxu0 %v444
        %v723 = vpop.f32.mrb[0].mxu0
        %v724 = vadd.f32 0.0, %v723
        %v725 = vpop.f32.mrb[0].mxu0
        %v726 = vpop.f32.mrb[0].mxu0
        %v727 = vadd.f32 0.0, %v726
        %v728 = vpop.f32.mrb[0].mxu0
        %729 = vmatprep.mubr.bf16.mxu0 0
        %730 = vmatmul.mubr.bf16.gmra.mrb[0].mxu0 %v445
        %v731 = vpop.f32.mrb[0].mxu0
        %v732 = vadd.f32 0.0, %v731
        %v733 = vpop.f32.mrb[0].mxu0
        %v734 = vpop.f32.mrb[0].mxu0
        %v735 = vadd.f32 0.0, %v734
        %v736 = vpop.f32.mrb[0].mxu0
        %737 = vmatprep.mubr.bf16.mxu0 0
        %738 = vmatmul.mubr.bf16.gmra.mrb[0].mxu0 %v446
        %v739 = vpop.f32.mrb[0].mxu0
        %v740 = vadd.f32 0.0, %v739
        %v741 = vpop.f32.mrb[0].mxu0
        %v742 = vpop.f32.mrb[0].mxu0
        %v743 = vadd.f32 0.0, %v742
        %v744 = vpop.f32.mrb[0].mxu0
        %745 = vmatprep.mubr.bf16.mxu0 0
        %746 = vmatmul.mubr.bf16.gmra.mrb[0].mxu0 %v447
        %v747 = vpop.f32.mrb[0].mxu0
        %v748 = vadd.f32 0.0, %v747
        %v749 = vpop.f32.mrb[0].mxu0
        %v750 = vpop.f32.mrb[0].mxu0
        %v751 = vadd.f32 0.0, %v750
        %v752 = vpop.f32.mrb[0].mxu0
        %753 = vmatprep.mubr.bf16.mxu0 0
        %754 = vmatmul.mubr.bf16.gmra.mrb[0].mxu0 %v448
        %v755 = vpop.f32.mrb[0].mxu0
        %v756 = vadd.f32 0.0, %v755
        %v757 = vpop.f32.mrb[0].mxu0
        %v758 = vpop.f32.mrb[0].mxu0
        %v759 = vadd.f32 0.0, %v758
        %v760 = vpop.f32.mrb[0].mxu0
        %761 = vmatprep.mubr.bf16.mxu0 0
        %762 = vmatmul.mubr.bf16.gmra.mrb[0].mxu0 %v449
        %v763 = vpop.f32.mrb[0].mxu0
        %v764 = vadd.f32 0.0, %v763
        %v765 = vpop.f32.mrb[0].mxu0
        %v766 = vpop.f32.mrb[0].mxu0
        %v767 = vadd.f32 0.0, %v766
        %v768 = vpop.f32.mrb[0].mxu0
        %769 = vmatprep.mubr.bf16.mxu0 0
        %770 = vmatmul.mubr.bf16.gmra.mrb[0].mxu0 %v450
        %v771 = vpop.f32.mrb[0].mxu0
        %v772 = vadd.f32 0.0, %v771
        %v773 = vpop.f32.mrb[0].mxu0
        %v774 = vpop.f32.mrb[0].mxu0
        %v775 = vadd.f32 0.0, %v774
        %v776 = vpop.f32.mrb[0].mxu0
        %777 = vmatprep.mubr.bf16.mxu0 0
        %778 = vmatmul.mubr.bf16.gmra.mrb[0].mxu0 %v451
        %v779 = vpop.f32.mrb[0].mxu0
        %v780 = vadd.f32 0.0, %v779
        %v781 = vpop.f32.mrb[0].mxu0
        %v782 = vpop.f32.mrb[0].mxu0
        %v783 = vadd.f32 0.0, %v782
        %v784 = vpop.f32.mrb[0].mxu0
        %785 = vmatprep.mubr.bf16.mxu0 0
        %786 = vmatmul.mubr.bf16.gmra.mrb[0].mxu0 %v452
        %v787 = vpop.f32.mrb[0].mxu0
        %v788 = vadd.f32 0.0, %v787
        %v789 = vpop.f32.mrb[0].mxu0
        %v790 = vpop.f32.mrb[0].mxu0
        %v791 = vadd.f32 0.0, %v790
        %v792 = vpop.f32.mrb[0].mxu0
        %793 = vmatprep.mubr.bf16.mxu0 0
        %794 = vmatmul.mubr.bf16.gmra.mrb[0].mxu0 %v453
        %v795 = vpop.f32.mrb[0].mxu0
        %v796 = vadd.f32 0.0, %v795
        %v797 = vpop.f32.mrb[0].mxu0
        %v798 = vpop.f32.mrb[0].mxu0
        %v799 = vadd.f32 0.0, %v798
        %v800 = vpop.f32.mrb[0].mxu0
        %801 = vmatprep.mubr.bf16.mxu0 0
        %802 = vmatmul.mubr.bf16.gmra.mrb[0].mxu0 %v454
        %v803 = vpop.f32.mrb[0].mxu0
        %v804 = vadd.f32 0.0, %v803
        %v805 = vpop.f32.mrb[0].mxu0
        %v806 = vpop.f32.mrb[0].mxu0
        %v807 = vadd.f32 0.0, %v806
        %v808 = vpop.f32.mrb[0].mxu0
        %809 = vmatprep.mubr.bf16.mxu0 0
        %810 = vmatmul.mubr.bf16.gmra.mrb[0].mxu0 %v455
        %v811 = vpop.f32.mrb[0].mxu0
        %v812 = vadd.f32 0.0, %v811
        %v813 = vpop.f32.mrb[0].mxu0
        %v814 = vpop.f32.mrb[0].mxu0
        %v815 = vadd.f32 0.0, %v814
        %v816 = vpop.f32.mrb[0].mxu0
        %817 = vmatprep.mubr.bf16.mxu0 0
        %818 = vmatmul.mubr.bf16.gmra.mrb[0].mxu0 %v456
        %v819 = vpop.f32.mrb[0].mxu0
        %v820 = vadd.f32 0.0, %v819
        %v821 = vpop.f32.mrb[0].mxu0
        %v822 = vpop.f32.mrb[0].mxu0
        %v823 = vadd.f32 0.0, %v822
        %v824 = vpop.f32.mrb[0].mxu0
        %825 = vdwg.mxu0
        %v826 = vadd.f32 %v572, %v575
        %v827 = vadd.f32 %v826, %v580
        %v828 = vadd.f32 %v827, %v583
        %v829 = vadd.f32 %v828, %v588
        %v830 = vadd.f32 %v829, %v591
        %v831 = vadd.f32 %v830, %v596
        %v832 = vadd.f32 %v831, %v599
        %v833 = vadd.f32 %v832, %v604
        %v834 = vadd.f32 %v833, %v607
        %v835 = vadd.f32 %v834, %v612
        %v836 = vadd.f32 %v835, %v615
        %v837 = vadd.f32 %v836, %v620
        %v838 = vadd.f32 %v837, %v623
        %v839 = vadd.f32 %v838, %v628
        %v840 = vadd.f32 %v839, %v631
        %v841 = vadd.f32 %v840, %v636
        %v842 = vadd.f32 %v841, %v639
        %v843 = vadd.f32 %v842, %v644
        %v844 = vadd.f32 %v843, %v647
        %v845 = vadd.f32 %v844, %v652
        %v846 = vadd.f32 %v845, %v655
        %v847 = vadd.f32 %v846, %v660
        %v848 = vadd.f32 %v847, %v663
        %v849 = vadd.f32 %v848, %v668
        %v850 = vadd.f32 %v849, %v671
        %v851 = vadd.f32 %v850, %v676
        %v852 = vadd.f32 %v851, %v679
        %v853 = vadd.f32 %v852, %v684
        %v854 = vadd.f32 %v853, %v687
        %v855 = vadd.f32 %v854, %v692
        %v856 = vadd.f32 %v855, %v695
        %v857 = vadd.f32 %v856, %v700
        %v858 = vadd.f32 %v857, %v703
        %v859 = vadd.f32 %v858, %v708
        %v860 = vadd.f32 %v859, %v711
        %v861 = vadd.f32 %v860, %v716
        %v862 = vadd.f32 %v861, %v719
        %v863 = vadd.f32 %v862, %v724
        %v864 = vadd.f32 %v863, %v727
        %v865 = vadd.f32 %v864, %v732
        %v866 = vadd.f32 %v865, %v735
        %v867 = vadd.f32 %v866, %v740
        %v868 = vadd.f32 %v867, %v743
        %v869 = vadd.f32 %v868, %v748
        %v870 = vadd.f32 %v869, %v751
        %v871 = vadd.f32 %v870, %v756
        %v872 = vadd.f32 %v871, %v759
        %v873 = vadd.f32 %v872, %v764
        %v874 = vadd.f32 %v873, %v767
        %v875 = vadd.f32 %v874, %v772
        %v876 = vadd.f32 %v875, %v775
        %v877 = vadd.f32 %v876, %v780
        %v878 = vadd.f32 %v877, %v783
        %v879 = vadd.f32 %v878, %v788
        %v880 = vadd.f32 %v879, %v791
        %v881 = vadd.f32 %v880, %v796
        %v882 = vadd.f32 %v881, %v799
        %v883 = vadd.f32 %v882, %v804
        %v884 = vadd.f32 %v883, %v807
        %v885 = vadd.f32 %v884, %v812
        %v886 = vadd.f32 %v885, %v815
        %v887 = vadd.f32 %v886, %v820
        %v888 = vadd.f32 %v887, %v823
        %889 = vst [vmem:[%s207] sm:$0xff] %v888
        %v890 = vmul.f32 %v572, %v572
        %v891 = vmul.f32 %v575, %v575
        %v892 = vmul.f32 %v580, %v580
        %v893 = vmul.f32 %v583, %v583
        %v894 = vmul.f32 %v588, %v588
        %v895 = vmul.f32 %v591, %v591
        %v896 = vmul.f32 %v596, %v596
        %v897 = vmul.f32 %v599, %v599
        %v898 = vmul.f32 %v604, %v604
        %v899 = vmul.f32 %v607, %v607
        %v900 = vmul.f32 %v612, %v612
        %v901 = vmul.f32 %v615, %v615
        %v902 = vmul.f32 %v620, %v620
        %v903 = vmul.f32 %v623, %v623
        %v904 = vmul.f32 %v628, %v628
        %v905 = vmul.f32 %v631, %v631
        %v906 = vmul.f32 %v636, %v636
        %v907 = vmul.f32 %v639, %v639
        %v908 = vmul.f32 %v644, %v644
        %v909 = vmul.f32 %v647, %v647
        %v910 = vmul.f32 %v652, %v652
        %v911 = vmul.f32 %v655, %v655
        %v912 = vmul.f32 %v660, %v660
        %v913 = vmul.f32 %v663, %v663
        %v914 = vmul.f32 %v668, %v668
        %v915 = vmul.f32 %v671, %v671
        %v916 = vmul.f32 %v676, %v676
        %v917 = vmul.f32 %v679, %v679
        %v918 = vmul.f32 %v684, %v684
        %v919 = vmul.f32 %v687, %v687
        %v920 = vmul.f32 %v692, %v692
        %v921 = vmul.f32 %v695, %v695
        %v922 = vmul.f32 %v700, %v700
        %v923 = vmul.f32 %v703, %v703
        %v924 = vmul.f32 %v708, %v708
        %v925 = vmul.f32 %v711, %v711
        %v926 = vmul.f32 %v716, %v716
        %v927 = vmul.f32 %v719, %v719
        %v928 = vmul.f32 %v724, %v724
        %v929 = vmul.f32 %v727, %v727
        %v930 = vmul.f32 %v732, %v732
        %v931 = vmul.f32 %v735, %v735
        %v932 = vmul.f32 %v740, %v740
        %v933 = vmul.f32 %v743, %v743
        %v934 = vmul.f32 %v748, %v748
        %v935 = vmul.f32 %v751, %v751
        %v936 = vmul.f32 %v756, %v756
        %v937 = vmul.f32 %v759, %v759
        %v938 = vmul.f32 %v764, %v764
        %v939 = vmul.f32 %v767, %v767
        %v940 = vmul.f32 %v772, %v772
        %v941 = vmul.f32 %v775, %v775
        %v942 = vmul.f32 %v780, %v780
        %v943 = vmul.f32 %v783, %v783
        %v944 = vmul.f32 %v788, %v788
        %v945 = vmul.f32 %v791, %v791
        %v946 = vmul.f32 %v796, %v796
        %v947 = vmul.f32 %v799, %v799
        %v948 = vmul.f32 %v804, %v804
        %v949 = vmul.f32 %v807, %v807
        %v950 = vmul.f32 %v812, %v812
        %v951 = vmul.f32 %v815, %v815
        %v952 = vmul.f32 %v820, %v820
        %v953 = vmul.f32 %v823, %v823
        %v954 = vadd.f32 %v890, %v891
        %v955 = vadd.f32 %v954, %v892
        %v956 = vadd.f32 %v955, %v893
        %v957 = vadd.f32 %v956, %v894
        %v958 = vadd.f32 %v957, %v895
        %v959 = vadd.f32 %v958, %v896
        %v960 = vadd.f32 %v959, %v897
        %v961 = vadd.f32 %v960, %v898
        %v962 = vadd.f32 %v961, %v899
        %v963 = vadd.f32 %v962, %v900
        %v964 = vadd.f32 %v963, %v901
        %v965 = vadd.f32 %v964, %v902
        %v966 = vadd.f32 %v965, %v903
        %v967 = vadd.f32 %v966, %v904
        %v968 = vadd.f32 %v967, %v905
        %v969 = vadd.f32 %v968, %v906
        %v970 = vadd.f32 %v969, %v907
        %v971 = vadd.f32 %v970, %v908
        %v972 = vadd.f32 %v971, %v909
        %v973 = vadd.f32 %v972, %v910
        %v974 = vadd.f32 %v973, %v911
        %v975 = vadd.f32 %v974, %v912
        %v976 = vadd.f32 %v975, %v913
        %v977 = vadd.f32 %v976, %v914
        %v978 = vadd.f32 %v977, %v915
        %v979 = vadd.f32 %v978, %v916
        %v980 = vadd.f32 %v979, %v917
        %v981 = vadd.f32 %v980, %v918
        %v982 = vadd.f32 %v981, %v919
        %v983 = vadd.f32 %v982, %v920
        %v984 = vadd.f32 %v983, %v921
        %v985 = vadd.f32 %v984, %v922
        %v986 = vadd.f32 %v985, %v923
        %v987 = vadd.f32 %v986, %v924
        %v988 = vadd.f32 %v987, %v925
        %v989 = vadd.f32 %v988, %v926
        %v990 = vadd.f32 %v989, %v927
        %v991 = vadd.f32 %v990, %v928
        %v992 = vadd.f32 %v991, %v929
        %v993 = vadd.f32 %v992, %v930
        %v994 = vadd.f32 %v993, %v931
        %v995 = vadd.f32 %v994, %v932
        %v996 = vadd.f32 %v995, %v933
        %v997 = vadd.f32 %v996, %v934
        %v998 = vadd.f32 %v997, %v935
        %v999 = vadd.f32 %v998, %v936
        %v1000 = vadd.f32 %v999, %v937
        %v1001 = vadd.f32 %v1000, %v938
        %v1002 = vadd.f32 %v1001, %v939
        %v1003 = vadd.f32 %v1002, %v940
        %v1004 = vadd.f32 %v1003, %v941
        %v1005 = vadd.f32 %v1004, %v942
        %v1006 = vadd.f32 %v1005, %v943
        %v1007 = vadd.f32 %v1006, %v944
        %v1008 = vadd.f32 %v1007, %v945
        %v1009 = vadd.f32 %v1008, %v946
        %v1010 = vadd.f32 %v1009, %v947
        %v1011 = vadd.f32 %v1010, %v948
        %v1012 = vadd.f32 %v1011, %v949
        %v1013 = vadd.f32 %v1012, %v950
        %v1014 = vadd.f32 %v1013, %v951
        %v1015 = vadd.f32 %v1014, %v952
        %v1016 = vadd.f32 %v1015, %v953
        %1017 = vst [vmem:[%s214] sm:$0xff] %v1016
        %s1018 = sand.u32 %s80, 1
        %s1019 = scalar_lea.sflag [#allocation4], %s1018
        %s1020 = sand.u32 %s80, 1
        %s1021 = smul.addr %s1020, 8
        %s1022 = scalar_lea.vmem [#allocation7], %s1021
        %s1023 = sand.u32 %s106, 1
        %s1024 = scalar_lea.sflag [#allocation9], %s1023
        %s1025 = sand.u32 %s106, 1
        %s1026 = smul.addr %s1025, 8
        %s1027 = scalar_lea.vmem [#allocation8], %s1026
        // Predicated region
        $region37: #{tpu_custom_call.1} parent=27 // pred_check
          %p1028 = pneg %p90
        $region38: #{tpu_custom_call.1} parent=27 // pred_check_branch
          %1030 = sbr.rel (%p1028) target = $region40
        $region39: #{tpu_custom_call.1} parent=27 // pred_region
          %s1032 = ssub.s32 128, 128
          %1033 = vsyncadd %s1019, %s1032
          %s1034 = smul.addr %s25, 128
          %s1035 = scalar_lea.hbm %s2, %s1034
          %s1037 = sshll.u32 %s1022, 4
          %s1038 = int_to_ptr.vmem [resolvable:$true] %s1037
          %1040 = dma.vmem_to_hbm [thread:$0]  %s1038, 128, %s1035, %s1019
        $region40: #{tpu_custom_call.1} parent=27 // pred_fallthru
          _
        // Predicated region
        $region41: #{tpu_custom_call.1} parent=27 // pred_check
          %p1041 = pneg %p116
        $region42: #{tpu_custom_call.1} parent=27 // pred_check_branch
          %1043 = sbr.rel (%p1041) target = $region44
        $region43: #{tpu_custom_call.1} parent=27 // pred_region
          %s1045 = ssub.s32 128, 128
          %1046 = vsyncadd %s1024, %s1045
          %s1047 = smul.addr %s25, 128
          %s1048 = scalar_lea.hbm %s3, %s1047
          %s1050 = sshll.u32 %s1027, 4
          %s1051 = int_to_ptr.vmem [resolvable:$true] %s1050
          %1053 = dma.vmem_to_hbm [thread:$0]  %s1051, 128, %s1048, %s1024
        $region44: #{tpu_custom_call.1} parent=27 // pred_fallthru
          _
      $region28: #{tpu_custom_call.1} parent=5 // pred_fallthru
        _
      %p1054 = scmp.le.s32.totalorder 2, %s20
      // Predicated region
      $region45: #{tpu_custom_call.1} parent=5 // pred_check
        %p1055 = pneg %p1054
      $region46: #{tpu_custom_call.1} parent=5 // pred_check_branch
        %1057 = sbr.rel (%p1055) target = $region48
      $region47: #{tpu_custom_call.1} parent=5 // pred_region
        %s1058 = ssub.s32 %s20, 2
        // Predicated region
        $region49: #{tpu_custom_call.1} parent=47 // pred_check
          %p1059 = pneg %p96
        $region50: #{tpu_custom_call.1} parent=47 // pred_check_branch
          %1061 = sbr.rel (%p1059) target = $region52
        $region51: #{tpu_custom_call.1} parent=47 // pred_region
          %s1062 = sand.u32 %s81, 1
          %s1063 = scalar_lea.sflag [#allocation4], %s1062
          %s1064 = sand.u32 %s81, 1
          %s1065 = smul.addr %s1064, 8
          %s1066 = scalar_lea.vmem [#allocation7], %s1065
          %1067 = dma.done %s1063, 128
        $region52: #{tpu_custom_call.1} parent=47 // pred_fallthru
          _
        // Predicated region
        $region53: #{tpu_custom_call.1} parent=47 // pred_check
          %p1068 = pneg %p122
        $region54: #{tpu_custom_call.1} parent=47 // pred_check_branch
          %1070 = sbr.rel (%p1068) target = $region56
        $region55: #{tpu_custom_call.1} parent=47 // pred_region
          %s1071 = sand.u32 %s107, 1
          %s1072 = scalar_lea.sflag [#allocation9], %s1071
          %s1073 = sand.u32 %s107, 1
          %s1074 = smul.addr %s1073, 8
          %s1075 = scalar_lea.vmem [#allocation8], %s1074
          %1076 = dma.done %s1072, 128
        $region56: #{tpu_custom_call.1} parent=47 // pred_fallthru
          _
      $region48: #{tpu_custom_call.1} parent=5 // pred_fallthru
        _
    $region6: #{tpu_custom_call.1} parent=1 // loop_footer
      %s24 = sadd.s32 1, %s20
    $region7: #{tpu_custom_call.1} parent=1 // loop_footer_branch
      %19 = sbr.rel target = $region3
    $region8: #{tpu_custom_call.1} parent=1 // loop_exit
      _
    %1077 = vsyncpa [#allocation3], 1
    %s1078 = scalar_lea.sflag [#allocation3], 1
    %1079 = vsyncpa %s1078, 1
    %1080 = vsyncpa [#allocation6], 1
    %1081 = vsyncpa [#allocation4], 1
    %s1082 = scalar_lea.sflag [#allocation4], 1
    %1083 = vsyncpa %s1082, 1
    %1084 = vsyncpa [#allocation9], 1
    %s1085 = scalar_lea.sflag [#allocation9], 1
    %1086 = vsyncpa %s1085, 1

</llo_original>
